<compile_context>
chip_gen: v7x
topology: tpu7x:2x2x1
jax: 0.10.0
libtpu: 0.0.40
codegen_flags: <defaults>
</compile_context>

<pallas_src>
import jax
import jax.numpy as jnp
from jax import lax
from jax.experimental import pallas as pl
from jax.experimental.pallas import tpu as pltpu


def _round_up(x, m):
    return (x + m - 1) // m * m


def _cdiv(a, b):
    return -(-a // b)


# -----------------------------------------------------------------------------
# Kernel: one fused im2col GEMM + reparametrize per row tile.
# -----------------------------------------------------------------------------
def _make_kernel(NH):
    def kernel(x_ref, w_ref, b_ref, eps_ref, mu_ref, lv_ref, z_ref):
        # Single lane-dense MXU matmul: (TM, K) x (K, 2*NH), f32 accumulation.
        out = jnp.dot(x_ref[...], w_ref[...],
                      preferred_element_type=jnp.float32) + b_ref[...]
        mu = out[:, :NH]                    # 128-aligned lane slices
        lv = out[:, NH:]
        std = jnp.exp(0.5 * lv)             # f32 exp on the EUP slot
        z = mu + eps_ref[...] * std
        mu_ref[...] = mu.astype(mu_ref.dtype)
        lv_ref[...] = lv.astype(lv_ref.dtype)
        z_ref[...] = z.astype(z_ref.dtype)

    return kernel


# -----------------------------------------------------------------------------
# One-time parameter packing (hoisted off the forward critical path)
# -----------------------------------------------------------------------------
def prepare_params(w_mu, b_mu, w_lv, b_lv):
    """Pack the two PyTorch OIHW conv heads into one im2col-ordered, lane-padded
    bf16 weight of shape (KH*KW*Cin, 2*NH) plus a fused f32 bias (1, 2*NH)."""
    Clat, Cin, KH, KW = w_mu.shape
    NH = _round_up(Clat, 128)

    def pack_w(w):
        # OIHW -> (kh, kw, cin, cout) -> (KH*KW*Cin, Clat), zero lane pad to NH.
        wt = jnp.transpose(w, (2, 3, 1, 0)).reshape(KH * KW * Cin, Clat)
        return jnp.pad(wt, ((0, 0), (0, NH - Clat)))

    def pack_b(b):
        return jnp.pad(b, (0, NH - Clat))

    w_fused = jnp.concatenate([pack_w(w_mu), pack_w(w_lv)], axis=-1)
    w_fused = w_fused.astype(jnp.bfloat16)                        # (K, 2*NH)
    bias = jnp.concatenate([pack_b(b_mu), pack_b(b_lv)])
    bias = bias.reshape(1, 2 * NH).astype(jnp.float32)            # (1, 2*NH)
    meta = (Clat, Cin, KH, KW, NH)
    return w_fused, bias, meta


# -----------------------------------------------------------------------------
# Forward wrapper
# -----------------------------------------------------------------------------
def reparametrize_forward(x, w_fused, bias, meta, key):
    """x: (B, Cin, H, W) NCHW.  Returns (mu, logvar, z), each NCHW
    (B, Clat, H-KH+1, W-KW+1); batch dim dropped only when the torch-style
    squeeze() genuinely produced an unbatched 3-D input."""
    Clat, Cin, KH, KW, NH = meta
    N2 = 2 * NH

    x = jnp.squeeze(x)                       # mirror torch's x.squeeze()
    unbatched = x.ndim == 3                  # Conv2d also accepts unbatched 3-D
    if unbatched:
        x = x[None]
    if x.ndim != 4 or x.shape[1] != Cin:
        raise ValueError(f"unexpected input shape after squeeze: {x.shape}")

    B, _, H, W = x.shape
    OH, OW = H - KH + 1, W - KW + 1
    K = KH * KW * Cin
    rows = B * OH * OW

    # Full im2col in XLA (cheap one-time pass; feature order kh, kw, cin
    # matches the packed weight), with the batch flattened into the row axis.
    x_nhwc = jnp.transpose(x, (0, 2, 3, 1))                       # (B, H, W, Cin)
    patches = [x_nhwc[:, kh:kh + OH, kw:kw + OW, :]
               for kh in range(KH) for kw in range(KW)]
    x_col = jnp.concatenate(patches, axis=-1).reshape(rows, K)
    x_col = x_col.astype(jnp.bfloat16)

    TM = min(512, _round_up(rows, 8))
    num_t = _cdiv(rows, TM)
    M_total = num_t * TM
    x_col = jnp.pad(x_col, ((0, M_total - rows), (0, 0)))

    # eps ~ N(0,1) drawn in XLA and streamed in (portable to interpret mode;
    # keeps the kernel's single EUP slot free for exp()).
    eps = jax.random.normal(key, (M_total, NH), dtype=jnp.float32)

    kernel = _make_kernel(NH)
    out_sds = jax.ShapeDtypeStruct((M_total, NH), jnp.float32)
    out_spec = pl.BlockSpec((TM, NH), lambda t: (t, 0))

    mu_r, lv_r, z_r = pl.pallas_call(
        kernel,
        out_shape=(out_sds, out_sds, out_sds),
        grid_spec=pltpu.PrefetchScalarGridSpec(
            num_scalar_prefetch=0,
            grid=(num_t,),
            in_specs=[
                pl.BlockSpec((TM, K), lambda t: (t, 0)),    # im2col rows
                pl.BlockSpec((K, N2), lambda t: (0, 0)),    # fused weight
                pl.BlockSpec((1, N2), lambda t: (0, 0)),    # fused bias
                pl.BlockSpec((TM, NH), lambda t: (t, 0)),   # eps
            ],
            out_specs=(out_spec, out_spec, out_spec),
        ),
        compiler_params=pltpu.CompilerParams(
            dimension_semantics=("parallel",)),
    )(x_col, w_fused, bias, eps)

    def unpack(o):
        o = o[:rows, :Clat].reshape(B, OH, OW, Clat)
        o = jnp.transpose(o, (0, 3, 1, 2))                        # -> NCHW
        return o[0] if unbatched else o

    return unpack(mu_r), unpack(lv_r), unpack(z_r)


# -----------------------------------------------------------------------------
# Test
# -----------------------------------------------------------------------------
if __name__ == "__main__":
    # Small shapes consistent with the module (scaled-down channel counts).
    B, Cin, H, W = 2, 32, 8, 8
    Clat, KSZ = 16, 4

    key = jax.random.PRNGKey(0)
    kx, k1, k2, k3, k4, keps = jax.random.split(key, 6)

    x = jax.random.normal(kx, (B, Cin, H, W), dtype=jnp.float32)
    fan_in = Cin * KSZ * KSZ
    bound = 1.0 / (fan_in ** 0.5)
    w_mu = jax.random.uniform(k1, (Clat, Cin, KSZ, KSZ), jnp.float32, -bound, bound)
    b_mu = jax.random.uniform(k2, (Clat,), jnp.float32, -bound, bound)
    w_lv = jax.random.uniform(k3, (Clat, Cin, KSZ, KSZ), jnp.float32, -bound, bound)
    b_lv = jax.random.uniform(k4, (Clat,), jnp.float32, -bound, bound)

    w_fused, bias, meta = prepare_params(w_mu, b_mu, w_lv, b_lv)

    mu, logvar, z = reparametrize_forward(x, w_fused, bias, meta, keps)
    jax.block_until_ready((mu, logvar, z))

    OH = OW = H - KSZ + 1
    assert mu.shape == (B, Clat, OH, OW)
    assert logvar.shape == mu.shape and z.shape == mu.shape

    # mu / logvar vs. an independent JAX conv reference (same bf16 operands,
    # f32 accumulation -> only summation-order differences remain).
    dn = ("NCHW", "OIHW", "NCHW")

    def conv_ref(w, b):
        y = lax.conv_general_dilated(
            x.astype(jnp.bfloat16), w.astype(jnp.bfloat16), (1, 1), "VALID",
            dimension_numbers=dn, preferred_element_type=jnp.float32)
        return y + b[None, :, None, None]

    mu_ref = conv_ref(w_mu, b_mu)
    lv_ref = conv_ref(w_lv, b_lv)
    assert jnp.allclose(mu, mu_ref, atol=2e-3, rtol=2e-3)
    assert jnp.allclose(logvar, lv_ref, atol=2e-3, rtol=2e-3)

    # z = mu + eps * std with eps ~ N(0,1): recover eps and sanity-check it is
    # a standard-normal draw (the stream differs from torch.randn_like).
    eps_hat = (z - mu) * jnp.exp(-0.5 * logvar)
    assert bool(jnp.all(jnp.isfinite(eps_hat)))
    assert abs(float(eps_hat.mean())) < 0.25
    assert 0.7 < float(eps_hat.std()) < 1.3

    print("KERNEL_OK")
</pallas_src>

<mosaic_0001>
module attributes {stable_mosaic.version = 11 : i64} {
  func.func @kernel(%arg0: i32, %arg1: memref<56x512xbf16, #tpu.memory_space<vmem>>, %arg2: memref<512x256xbf16, #tpu.memory_space<vmem>>, %arg3: memref<1x256xf32, #tpu.memory_space<vmem>>, %arg4: memref<56x128xf32, #tpu.memory_space<vmem>>, %arg5: memref<56x128xf32, #tpu.memory_space<vmem>>, %arg6: memref<56x128xf32, #tpu.memory_space<vmem>>, %arg7: memref<56x128xf32, #tpu.memory_space<vmem>>) attributes {dimension_semantics = [#tpu.dimension_semantics<parallel>], iteration_bounds = array<i64: 1>, scalar_prefetch = 0 : i64, scratch_operands = 0 : i64, tpu.core_type = #tpu.core_type<tc>, window_params = [{transform_indices = @transform_0, window_bounds = array<i64: 56, 512>}, {pipeline_mode = #tpu.pipeline_mode<synchronous>, transform_indices = @transform_1, window_bounds = array<i64: 512, 256>}, {pipeline_mode = #tpu.pipeline_mode<synchronous>, transform_indices = @transform_2, window_bounds = array<i64: 1, 256>}, {transform_indices = @transform_3, window_bounds = array<i64: 56, 128>}, {transform_indices = @transform_4, window_bounds = array<i64: 56, 128>}, {transform_indices = @transform_5, window_bounds = array<i64: 56, 128>}, {transform_indices = @transform_6, window_bounds = array<i64: 56, 128>}]} {
    %c0 = arith.constant 0 : index
    %c0_0 = arith.constant 0 : index
    %0 = vector.load %arg1[%c0, %c0_0] : memref<56x512xbf16, #tpu.memory_space<vmem>>, vector<56x512xbf16>
    %c0_1 = arith.constant 0 : index
    %c0_2 = arith.constant 0 : index
    %1 = vector.load %arg2[%c0_1, %c0_2] : memref<512x256xbf16, #tpu.memory_space<vmem>>, vector<512x256xbf16>
    %cst = arith.constant dense<0.000000e+00> : vector<56x256xf32>
    %2 = tpu.matmul %0, %1, %cst {dimension_numbers = #tpu.dot_dimension_numbers<[1], [0], [0], [1], [0, 0, 1, 1], [], []>} : vector<56x512xbf16>, vector<512x256xbf16>, vector<56x256xf32> -> vector<56x256xf32>
    %c0_3 = arith.constant 0 : index
    %c0_4 = arith.constant 0 : index
    %3 = vector.load %arg3[%c0_3, %c0_4] : memref<1x256xf32, #tpu.memory_space<vmem>>, vector<1x256xf32>
    %4 = vector.broadcast %3 : vector<1x256xf32> to vector<56x256xf32>
    %5 = arith.addf %2, %4 : vector<56x256xf32>
    %6 = vector.extract_strided_slice %5 {offsets = [0, 0], sizes = [56, 128], strides = [1, 1]} : vector<56x256xf32> to vector<56x128xf32>
    %7 = vector.extract_strided_slice %5 {offsets = [0, 128], sizes = [56, 128], strides = [1, 1]} : vector<56x256xf32> to vector<56x128xf32>
    %cst_5 = arith.constant 5.000000e-01 : f32
    %8 = vector.broadcast %cst_5 : f32 to vector<56x128xf32>
    %9 = arith.mulf %8, %7 : vector<56x128xf32>
    %10 = math.exp %9 : vector<56x128xf32>
    %c0_6 = arith.constant 0 : index
    %c0_7 = arith.constant 0 : index
    %11 = vector.load %arg4[%c0_6, %c0_7] : memref<56x128xf32, #tpu.memory_space<vmem>>, vector<56x128xf32>
    %12 = arith.mulf %11, %10 : vector<56x128xf32>
    %13 = arith.addf %6, %12 : vector<56x128xf32>
    %c0_8 = arith.constant 0 : index
    %c0_9 = arith.constant 0 : index
    %14 = vector.load %arg5[%c0_8, %c0_9] : memref<56x128xf32, #tpu.memory_space<vmem>>, vector<56x128xf32>
    tpu.vector_store %arg5[%c0_8, %c0_9], %6 {strides = array<i32>} : memref<56x128xf32, #tpu.memory_space<vmem>>, vector<56x128xf32>,
    %c0_10 = arith.constant 0 : index
    %c0_11 = arith.constant 0 : index
    %15 = vector.load %arg6[%c0_10, %c0_11] : memref<56x128xf32, #tpu.memory_space<vmem>>, vector<56x128xf32>
    tpu.vector_store %arg6[%c0_10, %c0_11], %7 {strides = array<i32>} : memref<56x128xf32, #tpu.memory_space<vmem>>, vector<56x128xf32>,
    %c0_12 = arith.constant 0 : index
    %c0_13 = arith.constant 0 : index
    %16 = vector.load %arg7[%c0_12, %c0_13] : memref<56x128xf32, #tpu.memory_space<vmem>>, vector<56x128xf32>
    tpu.vector_store %arg7[%c0_12, %c0_13], %13 {strides = array<i32>} : memref<56x128xf32, #tpu.memory_space<vmem>>, vector<56x128xf32>,
    return
  }
  func.func @transform_0(%arg0: i32) -> (i32, i32) {
    %c0_i32 = arith.constant 0 : i32
    %c0_i32_0 = arith.constant 0 : i32
    return %arg0, %c0_i32 : i32, i32
  }
  func.func @transform_1(%arg0: i32) -> (i32, i32) {
    %c0_i32 = arith.constant 0 : i32
    %c0_i32_0 = arith.constant 0 : i32
    %c0_i32_1 = arith.constant 0 : i32
    return %c0_i32, %c0_i32_0 : i32, i32
  }
  func.func @transform_2(%arg0: i32) -> (i32, i32) {
    %c0_i32 = arith.constant 0 : i32
    %c0_i32_0 = arith.constant 0 : i32
    %c0_i32_1 = arith.constant 0 : i32
    return %c0_i32, %c0_i32_0 : i32, i32
  }
  func.func @transform_3(%arg0: i32) -> (i32, i32) {
    %c0_i32 = arith.constant 0 : i32
    %c0_i32_0 = arith.constant 0 : i32
    return %arg0, %c0_i32 : i32, i32
  }
  func.func @transform_4(%arg0: i32) -> (i32, i32) {
    %c0_i32 = arith.constant 0 : i32
    %c0_i32_0 = arith.constant 0 : i32
    return %arg0, %c0_i32 : i32, i32
  }
  func.func @transform_5(%arg0: i32) -> (i32, i32) {
    %c0_i32 = arith.constant 0 : i32
    %c0_i32_0 = arith.constant 0 : i32
    return %arg0, %c0_i32 : i32, i32
  }
  func.func @transform_6(%arg0: i32) -> (i32, i32) {
    %c0_i32 = arith.constant 0 : i32
    %c0_i32_0 = arith.constant 0 : i32
    return %arg0, %c0_i32 : i32, i32
  }
}

</mosaic_0001>

<llo_original>
// kernel: tpu_custom_call.1
$region0: #{tpu_custom_call.1}
  #allocation0 [shape = 'u32[]', space=smem, size = 0x4, offset = 0x4, fixed_abs, tag = 'smem constant byte address 0x4 - core index']
  #allocation1 [shape = 'u32[144,128]{1,0:T(1,128)}', space=vmem, size = 0x12000, scoped, tag = 'internal scratch']
  %s0 = inlined_call_operand.hbm [shape: bf16[56,512], index: 0, kind: input, shape index: {}]
  %s1 = inlined_call_operand.hbm [shape: bf16[512,256], index: 1, kind: input, shape index: {}]
  %s2 = inlined_call_operand.vmem [shape: f32[1,256], index: 2, kind: input, shape index: {}]
  %s3 = inlined_call_operand.hbm [shape: f32[56,128], index: 3, kind: input, shape index: {}]
  %s4 = inlined_call_operand.hbm [shape: f32[56,128], index: 4, kind: output, shape index: {0}]
  %s5 = inlined_call_operand.hbm [shape: f32[56,128], index: 5, kind: output, shape index: {1}]
  %s6 = inlined_call_operand.hbm [shape: f32[56,128], index: 6, kind: output, shape index: {2}]
  %7 = xla_tuple %s4, %s5, %s6
  %s8 = sld [smem:[#allocation0]]
  $region54: #{tpu_custom_call.1} parent=0
    _
  %s10 = ssub.s32 1, %s8
  %s11 = scalar_select 0, %s10, %s8
  $region1: #{tpu_custom_call.1} parent=0
    #allocation2 [shape = 'u8[57344]{0}', space=vmem, size = 0xe000, scoped, tag = 'input window, operand 0, single buffered']
    #allocation3 [shape = 's32[1]{0}', space=sflag, size = 0x4, scoped, tag = 'scoped memory for tpu_custom_call.1']
    #allocation4 [shape = 's32[1]{0}', space=sflag, size = 0x4, scoped, tag = 'scoped memory for tpu_custom_call.1']
    #allocation5 [shape = 'u8[262144]{0}', space=vmem, size = 0x40000, scoped, tag = 'input window, operand 1, single buffered']
    #allocation6 [shape = 's32[1]{0}', space=sflag, size = 0x4, scoped, tag = 'scoped memory for tpu_custom_call.1']
    #allocation7 [shape = 'u8[28672]{0}', space=vmem, size = 0x7000, scoped, tag = 'input window, operand 3, single buffered']
    #allocation8 [shape = 'u8[28672]{0}', space=vmem, size = 0x7000, scoped, tag = 'output window, operand 0, single buffered']
    #allocation9 [shape = 'u8[28672]{0}', space=vmem, size = 0x7000, scoped, tag = 'output window, operand 1, single buffered']
    #allocation10 [shape = 's32[1]{0}', space=sflag, size = 0x4, scoped, tag = 'scoped memory for tpu_custom_call.1']
    #allocation11 [shape = 'u8[28672]{0}', space=vmem, size = 0x7000, scoped, tag = 'output window, operand 2, single buffered']
    %12 = vsyncpa [#allocation3], 0
    %13 = vsyncpa [#allocation6], 0
    %14 = vsyncpa [#allocation4], 0
    %15 = vsyncpa [#allocation10], 0
    // Predicated region
    $region2: #{tpu_custom_call.1} parent=1 // pred_check
      _
    $region3: #{tpu_custom_call.1} parent=1 // pred_check_branch
      %17 = sbr.rel (0) target = $region5
    $region4: #{tpu_custom_call.1} parent=1 // pred_region
      %s19 = ssub.s32 1792, 1792
      %20 = vsyncadd [#allocation3], %s19
      %s21 = sshll.u32 [#allocation2], 4
      %s22 = int_to_ptr.vmem [resolvable:$true] %s21
      %27 = dma.hbm_to_vmem [thread:$0]  %s0, 1792, %s22, [#allocation3], 256, 256, 16
    $region5: #{tpu_custom_call.1} parent=1 // pred_fallthru
      _
    // Predicated region
    $region6: #{tpu_custom_call.1} parent=1 // pred_check
      _
    $region7: #{tpu_custom_call.1} parent=1 // pred_check_branch
      %29 = sbr.rel (0) target = $region9
    $region8: #{tpu_custom_call.1} parent=1 // pred_region
      %s31 = ssub.s32 8192, 8192
      %32 = vsyncadd [#allocation6], %s31
      %s33 = sshll.u32 [#allocation5], 4
      %s34 = int_to_ptr.vmem [resolvable:$true] %s33
      %39 = dma.hbm_to_vmem [thread:$0]  %s1, 8192, %s34, [#allocation6], 128, 128, 8
    $region9: #{tpu_custom_call.1} parent=1 // pred_fallthru
      _
    // Predicated region
    $region10: #{tpu_custom_call.1} parent=1 // pred_check
      _
    $region11: #{tpu_custom_call.1} parent=1 // pred_check_branch
      %41 = sbr.rel (0) target = $region13
    $region12: #{tpu_custom_call.1} parent=1 // pred_region
      _
    $region13: #{tpu_custom_call.1} parent=1 // pred_fallthru
      _
    // Predicated region
    $region14: #{tpu_custom_call.1} parent=1 // pred_check
      _
    $region15: #{tpu_custom_call.1} parent=1 // pred_check_branch
      %43 = sbr.rel (0) target = $region17
    $region16: #{tpu_custom_call.1} parent=1 // pred_region
      %s45 = ssub.s32 896, 896
      %46 = vsyncadd [#allocation6], %s45
      %s47 = sshll.u32 [#allocation7], 4
      %s48 = int_to_ptr.vmem [resolvable:$true] %s47
      %53 = dma.hbm_to_vmem [thread:$0]  %s3, 896, %s48, [#allocation6], 128, 128, 8
    $region17: #{tpu_custom_call.1} parent=1 // pred_fallthru
      _
    // Predicated region
    $region18: #{tpu_custom_call.1} parent=1 // pred_check
      _
    $region19: #{tpu_custom_call.1} parent=1 // pred_check_branch
      %55 = sbr.rel (0) target = $region21
    $region20: #{tpu_custom_call.1} parent=1 // pred_region
      %56 = dma.done [#allocation3], 1792
    $region21: #{tpu_custom_call.1} parent=1 // pred_fallthru
      _
    // Predicated region
    $region22: #{tpu_custom_call.1} parent=1 // pred_check
      _
    $region23: #{tpu_custom_call.1} parent=1 // pred_check_branch
      %58 = sbr.rel (0) target = $region25
    $region24: #{tpu_custom_call.1} parent=1 // pred_region
      %59 = dma.done [#allocation6], 8192
    $region25: #{tpu_custom_call.1} parent=1 // pred_fallthru
      _
    // Predicated region
    $region26: #{tpu_custom_call.1} parent=1 // pred_check
      _
    $region27: #{tpu_custom_call.1} parent=1 // pred_check_branch
      %61 = sbr.rel (0) target = $region29
    $region28: #{tpu_custom_call.1} parent=1 // pred_region
      %62 = dma.done [#allocation6], 896
    $region29: #{tpu_custom_call.1} parent=1 // pred_fallthru
      _
    %v63 = vld [vmem:[#allocation2] sm:$0xff]
    %v64 = vld [vmem:[#allocation2 + $0x8] sm:$0xff]
    %v65 = vld [vmem:[#allocation2 + $0x10] sm:$0xff]
    %v66 = vld [vmem:[#allocation2 + $0x18] sm:$0xff]
    %v67 = vld [vmem:[#allocation2 + $0x20] sm:$0xff]
    %v68 = vld [vmem:[#allocation2 + $0x28] sm:$0xff]
    %v69 = vld [vmem:[#allocation2 + $0x30] sm:$0xff]
    %v70 = vld [vmem:[#allocation2 + $0x38] sm:$0xff]
    %v71 = vld [vmem:[#allocation2 + $0x40] sm:$0xff]
    %v72 = vld [vmem:[#allocation2 + $0x48] sm:$0xff]
    %v73 = vld [vmem:[#allocation2 + $0x50] sm:$0xff]
    %v74 = vld [vmem:[#allocation2 + $0x58] sm:$0xff]
    %v75 = vld [vmem:[#allocation2 + $0x60] sm:$0xff]
    %v76 = vld [vmem:[#allocation2 + $0x68] sm:$0xff]
    %v77 = vld [vmem:[#allocation5] sm:$0xff]
    %v78 = vld [vmem:[#allocation5 + $0x8] sm:$0xff]
    %v79 = vld [vmem:[#allocation5 + $0x10] sm:$0xff]
    %v80 = vld [vmem:[#allocation5 + $0x18] sm:$0xff]
    %v81 = vld [vmem:[#allocation5 + $0x20] sm:$0xff]
    %v82 = vld [vmem:[#allocation5 + $0x28] sm:$0xff]
    %v83 = vld [vmem:[#allocation5 + $0x30] sm:$0xff]
    %v84 = vld [vmem:[#allocation5 + $0x38] sm:$0xff]
    %v85 = vld [vmem:[#allocation5 + $0x40] sm:$0xff]
    %v86 = vld [vmem:[#allocation5 + $0x48] sm:$0xff]
    %v87 = vld [vmem:[#allocation5 + $0x50] sm:$0xff]
    %v88 = vld [vmem:[#allocation5 + $0x58] sm:$0xff]
    %v89 = vld [vmem:[#allocation5 + $0x60] sm:$0xff]
    %v90 = vld [vmem:[#allocation5 + $0x68] sm:$0xff]
    %v91 = vld [vmem:[#allocation5 + $0x70] sm:$0xff]
    %v92 = vld [vmem:[#allocation5 + $0x78] sm:$0xff]
    %v93 = vld [vmem:[#allocation5 + $0x80] sm:$0xff]
    %v94 = vld [vmem:[#allocation5 + $0x88] sm:$0xff]
    %v95 = vld [vmem:[#allocation5 + $0x90] sm:$0xff]
    %v96 = vld [vmem:[#allocation5 + $0x98] sm:$0xff]
    %v97 = vld [vmem:[#allocation5 + $0xa0] sm:$0xff]
    %v98 = vld [vmem:[#allocation5 + $0xa8] sm:$0xff]
    %v99 = vld [vmem:[#allocation5 + $0xb0] sm:$0xff]
    %v100 = vld [vmem:[#allocation5 + $0xb8] sm:$0xff]
    %v101 = vld [vmem:[#allocation5 + $0xc0] sm:$0xff]
    %v102 = vld [vmem:[#allocation5 + $0xc8] sm:$0xff]
    %v103 = vld [vmem:[#allocation5 + $0xd0] sm:$0xff]
    %v104 = vld [vmem:[#allocation5 + $0xd8] sm:$0xff]
    %v105 = vld [vmem:[#allocation5 + $0xe0] sm:$0xff]
    %v106 = vld [vmem:[#allocation5 + $0xe8] sm:$0xff]
    %v107 = vld [vmem:[#allocation5 + $0xf0] sm:$0xff]
    %v108 = vld [vmem:[#allocation5 + $0xf8] sm:$0xff]
    %v109 = vld [vmem:[#allocation5 + $0x100] sm:$0xff]
    %v110 = vld [vmem:[#allocation5 + $0x108] sm:$0xff]
    %v111 = vld [vmem:[#allocation5 + $0x110] sm:$0xff]
    %v112 = vld [vmem:[#allocation5 + $0x118] sm:$0xff]
    %v113 = vld [vmem:[#allocation5 + $0x120] sm:$0xff]
    %v114 = vld [vmem:[#allocation5 + $0x128] sm:$0xff]
    %v115 = vld [vmem:[#allocation5 + $0x130] sm:$0xff]
    %v116 = vld [vmem:[#allocation5 + $0x138] sm:$0xff]
    %v117 = vld [vmem:[#allocation5 + $0x140] sm:$0xff]
    %v118 = vld [vmem:[#allocation5 + $0x148] sm:$0xff]
    %v119 = vld [vmem:[#allocation5 + $0x150] sm:$0xff]
    %v120 = vld [vmem:[#allocation5 + $0x158] sm:$0xff]
    %v121 = vld [vmem:[#allocation5 + $0x160] sm:$0xff]
    %v122 = vld [vmem:[#allocation5 + $0x168] sm:$0xff]
    %v123 = vld [vmem:[#allocation5 + $0x170] sm:$0xff]
    %v124 = vld [vmem:[#allocation5 + $0x178] sm:$0xff]
    %v125 = vld [vmem:[#allocation5 + $0x180] sm:$0xff]
    %v126 = vld [vmem:[#allocation5 + $0x188] sm:$0xff]
    %v127 = vld [vmem:[#allocation5 + $0x190] sm:$0xff]
    %v128 = vld [vmem:[#allocation5 + $0x198] sm:$0xff]
    %v129 = vld [vmem:[#allocation5 + $0x1a0] sm:$0xff]
    %v130 = vld [vmem:[#allocation5 + $0x1a8] sm:$0xff]
    %v131 = vld [vmem:[#allocation5 + $0x1b0] sm:$0xff]
    %v132 = vld [vmem:[#allocation5 + $0x1b8] sm:$0xff]
    %v133 = vld [vmem:[#allocation5 + $0x1c0] sm:$0xff]
    %v134 = vld [vmem:[#allocation5 + $0x1c8] sm:$0xff]
    %v135 = vld [vmem:[#allocation5 + $0x1d0] sm:$0xff]
    %v136 = vld [vmem:[#allocation5 + $0x1d8] sm:$0xff]
    %v137 = vld [vmem:[#allocation5 + $0x1e0] sm:$0xff]
    %v138 = vld [vmem:[#allocation5 + $0x1e8] sm:$0xff]
    %v139 = vld [vmem:[#allocation5 + $0x1f0] sm:$0xff]
    %v140 = vld [vmem:[#allocation5 + $0x1f8] sm:$0xff]
    %v141 = vld [vmem:[%s2] sm:$0x3]
    %v143 = vlaneseq
    %v144 = vshrl.u32 %v143, 7
    %v145 = vsub.s32 0, %v144
    %v146 = vrot.slane %v141, %v145
    %v147 = vlaneseq
    %v148 = vshrl.u32 %v147, 7
    %v149 = vsub.s32 1, %v148
    %v150 = vrot.slane %v141, %v149
    %v167 = vunpack.c.l.b16 %v63
    %v168 = vunpack.c.h.b16 %v63
    %v169 = vunpack.c.l.b16 %v64
    %v170 = vunpack.c.h.b16 %v64
    %v171 = vunpack.c.l.b16 %v65
    %v172 = vunpack.c.h.b16 %v65
    %v173 = vunpack.c.l.b16 %v66
    %v174 = vunpack.c.h.b16 %v66
    %v175 = vunpack.c.l.b16 %v67
    %v176 = vunpack.c.h.b16 %v67
    %v177 = vunpack.c.l.b16 %v68
    %v178 = vunpack.c.h.b16 %v68
    %v179 = vunpack.c.l.b16 %v69
    %v180 = vunpack.c.h.b16 %v69
    %v181 = vunpack.c.l.b16 %v70
    %v182 = vunpack.c.h.b16 %v70
    %v183 = vunpack.c.l.b16 %v71
    %v184 = vunpack.c.h.b16 %v71
    %v185 = vunpack.c.l.b16 %v72
    %v186 = vunpack.c.h.b16 %v72
    %v187 = vunpack.c.l.b16 %v73
    %v188 = vunpack.c.h.b16 %v73
    %v189 = vunpack.c.l.b16 %v74
    %v190 = vunpack.c.h.b16 %v74
    %v191 = vunpack.c.l.b16 %v75
    %v192 = vunpack.c.h.b16 %v75
    %v193 = vunpack.c.l.b16 %v76
    %v194 = vunpack.c.h.b16 %v76
    %v195 = vpack.c.b16 %v171, %v167
    %v196 = vpack.c.b16 %v172, %v168
    %v197 = vpack.c.b16 %v173, %v169
    %v198 = vpack.c.b16 %v174, %v170
    %v199 = vpack.c.b16 %v179, %v175
    %v200 = vpack.c.b16 %v180, %v176
    %v201 = vpack.c.b16 %v181, %v177
    %v202 = vpack.c.b16 %v182, %v178
    %v203 = vpack.c.b16 %v187, %v183
    %v204 = vpack.c.b16 %v188, %v184
    %v205 = vpack.c.b16 %v189, %v185
    %v206 = vpack.c.b16 %v190, %v186
    %v207 = vpack.c.b16 %v191, %v191
    %v208 = vpack.c.b16 %v192, %v192
    %v209 = vpack.c.b16 %v193, %v193
    %v210 = vpack.c.b16 %v194, %v194
    %v291 = vunpack.c.l.b16 %v77
    %v292 = vunpack.c.h.b16 %v77
    %v293 = vunpack.c.l.b16 %v78
    %v294 = vunpack.c.h.b16 %v78
    %v295 = vunpack.c.l.b16 %v79
    %v296 = vunpack.c.h.b16 %v79
    %v297 = vunpack.c.l.b16 %v80
    %v298 = vunpack.c.h.b16 %v80
    %v299 = vunpack.c.l.b16 %v81
    %v300 = vunpack.c.h.b16 %v81
    %v301 = vunpack.c.l.b16 %v82
    %v302 = vunpack.c.h.b16 %v82
    %v303 = vunpack.c.l.b16 %v83
    %v304 = vunpack.c.h.b16 %v83
    %v305 = vunpack.c.l.b16 %v84
    %v306 = vunpack.c.h.b16 %v84
    %v307 = vunpack.c.l.b16 %v85
    %v308 = vunpack.c.h.b16 %v85
    %v309 = vunpack.c.l.b16 %v86
    %v310 = vunpack.c.h.b16 %v86
    %v311 = vunpack.c.l.b16 %v87
    %v312 = vunpack.c.h.b16 %v87
    %v313 = vunpack.c.l.b16 %v88
    %v314 = vunpack.c.h.b16 %v88
    %v315 = vunpack.c.l.b16 %v89
    %v316 = vunpack.c.h.b16 %v89
    %v317 = vunpack.c.l.b16 %v90
    %v318 = vunpack.c.h.b16 %v90
    %v319 = vunpack.c.l.b16 %v91
    %v320 = vunpack.c.h.b16 %v91
    %v321 = vunpack.c.l.b16 %v92
    %v322 = vunpack.c.h.b16 %v92
    %v323 = vunpack.c.l.b16 %v93
    %v324 = vunpack.c.h.b16 %v93
    %v325 = vunpack.c.l.b16 %v94
    %v326 = vunpack.c.h.b16 %v94
    %v327 = vunpack.c.l.b16 %v95
    %v328 = vunpack.c.h.b16 %v95
    %v329 = vunpack.c.l.b16 %v96
    %v330 = vunpack.c.h.b16 %v96
    %v331 = vunpack.c.l.b16 %v97
    %v332 = vunpack.c.h.b16 %v97
    %v333 = vunpack.c.l.b16 %v98
    %v334 = vunpack.c.h.b16 %v98
    %v335 = vunpack.c.l.b16 %v99
    %v336 = vunpack.c.h.b16 %v99
    %v337 = vunpack.c.l.b16 %v100
    %v338 = vunpack.c.h.b16 %v100
    %v339 = vunpack.c.l.b16 %v101
    %v340 = vunpack.c.h.b16 %v101
    %v341 = vunpack.c.l.b16 %v102
    %v342 = vunpack.c.h.b16 %v102
    %v343 = vunpack.c.l.b16 %v103
    %v344 = vunpack.c.h.b16 %v103
    %v345 = vunpack.c.l.b16 %v104
    %v346 = vunpack.c.h.b16 %v104
    %v347 = vunpack.c.l.b16 %v105
    %v348 = vunpack.c.h.b16 %v105
    %v349 = vunpack.c.l.b16 %v106
    %v350 = vunpack.c.h.b16 %v106
    %v351 = vunpack.c.l.b16 %v107
    %v352 = vunpack.c.h.b16 %v107
    %v353 = vunpack.c.l.b16 %v108
    %v354 = vunpack.c.h.b16 %v108
    %v355 = vunpack.c.l.b16 %v109
    %v356 = vunpack.c.h.b16 %v109
    %v357 = vunpack.c.l.b16 %v110
    %v358 = vunpack.c.h.b16 %v110
    %v359 = vunpack.c.l.b16 %v111
    %v360 = vunpack.c.h.b16 %v111
    %v361 = vunpack.c.l.b16 %v112
    %v362 = vunpack.c.h.b16 %v112
    %v363 = vunpack.c.l.b16 %v113
    %v364 = vunpack.c.h.b16 %v113
    %v365 = vunpack.c.l.b16 %v114
    %v366 = vunpack.c.h.b16 %v114
    %v367 = vunpack.c.l.b16 %v115
    %v368 = vunpack.c.h.b16 %v115
    %v369 = vunpack.c.l.b16 %v116
    %v370 = vunpack.c.h.b16 %v116
    %v371 = vunpack.c.l.b16 %v117
    %v372 = vunpack.c.h.b16 %v117
    %v373 = vunpack.c.l.b16 %v118
    %v374 = vunpack.c.h.b16 %v118
    %v375 = vunpack.c.l.b16 %v119
    %v376 = vunpack.c.h.b16 %v119
    %v377 = vunpack.c.l.b16 %v120
    %v378 = vunpack.c.h.b16 %v120
    %v379 = vunpack.c.l.b16 %v121
    %v380 = vunpack.c.h.b16 %v121
    %v381 = vunpack.c.l.b16 %v122
    %v382 = vunpack.c.h.b16 %v122
    %v383 = vunpack.c.l.b16 %v123
    %v384 = vunpack.c.h.b16 %v123
    %v385 = vunpack.c.l.b16 %v124
    %v386 = vunpack.c.h.b16 %v124
    %v387 = vunpack.c.l.b16 %v125
    %v388 = vunpack.c.h.b16 %v125
    %v389 = vunpack.c.l.b16 %v126
    %v390 = vunpack.c.h.b16 %v126
    %v391 = vunpack.c.l.b16 %v127
    %v392 = vunpack.c.h.b16 %v127
    %v393 = vunpack.c.l.b16 %v128
    %v394 = vunpack.c.h.b16 %v128
    %v395 = vunpack.c.l.b16 %v129
    %v396 = vunpack.c.h.b16 %v129
    %v397 = vunpack.c.l.b16 %v130
    %v398 = vunpack.c.h.b16 %v130
    %v399 = vunpack.c.l.b16 %v131
    %v400 = vunpack.c.h.b16 %v131
    %v401 = vunpack.c.l.b16 %v132
    %v402 = vunpack.c.h.b16 %v132
    %v403 = vunpack.c.l.b16 %v133
    %v404 = vunpack.c.h.b16 %v133
    %v405 = vunpack.c.l.b16 %v134
    %v406 = vunpack.c.h.b16 %v134
    %v407 = vunpack.c.l.b16 %v135
    %v408 = vunpack.c.h.b16 %v135
    %v409 = vunpack.c.l.b16 %v136
    %v410 = vunpack.c.h.b16 %v136
    %v411 = vunpack.c.l.b16 %v137
    %v412 = vunpack.c.h.b16 %v137
    %v413 = vunpack.c.l.b16 %v138
    %v414 = vunpack.c.h.b16 %v138
    %v415 = vunpack.c.l.b16 %v139
    %v416 = vunpack.c.h.b16 %v139
    %v417 = vunpack.c.l.b16 %v140
    %v418 = vunpack.c.h.b16 %v140
    %v419 = vpack.c.b16 %v293, %v291
    %v420 = vpack.c.b16 %v294, %v292
    %v421 = vpack.c.b16 %v297, %v295
    %v422 = vpack.c.b16 %v298, %v296
    %v423 = vpack.c.b16 %v301, %v299
    %v424 = vpack.c.b16 %v302, %v300
    %v425 = vpack.c.b16 %v305, %v303
    %v426 = vpack.c.b16 %v306, %v304
    %v427 = vpack.c.b16 %v309, %v307
    %v428 = vpack.c.b16 %v310, %v308
    %v429 = vpack.c.b16 %v313, %v311
    %v430 = vpack.c.b16 %v314, %v312
    %v431 = vpack.c.b16 %v317, %v315
    %v432 = vpack.c.b16 %v318, %v316
    %v433 = vpack.c.b16 %v321, %v319
    %v434 = vpack.c.b16 %v322, %v320
    %v435 = vpack.c.b16 %v325, %v323
    %v436 = vpack.c.b16 %v326, %v324
    %v437 = vpack.c.b16 %v329, %v327
    %v438 = vpack.c.b16 %v330, %v328
    %v439 = vpack.c.b16 %v333, %v331
    %v440 = vpack.c.b16 %v334, %v332
    %v441 = vpack.c.b16 %v337, %v335
    %v442 = vpack.c.b16 %v338, %v336
    %v443 = vpack.c.b16 %v341, %v339
    %v444 = vpack.c.b16 %v342, %v340
    %v445 = vpack.c.b16 %v345, %v343
    %v446 = vpack.c.b16 %v346, %v344
    %v447 = vpack.c.b16 %v349, %v347
    %v448 = vpack.c.b16 %v350, %v348
    %v449 = vpack.c.b16 %v353, %v351
    %v450 = vpack.c.b16 %v354, %v352
    %v451 = vpack.c.b16 %v357, %v355
    %v452 = vpack.c.b16 %v358, %v356
    %v453 = vpack.c.b16 %v361, %v359
    %v454 = vpack.c.b16 %v362, %v360
    %v455 = vpack.c.b16 %v365, %v363
    %v456 = vpack.c.b16 %v366, %v364
    %v457 = vpack.c.b16 %v369, %v367
    %v458 = vpack.c.b16 %v370, %v368
    %v459 = vpack.c.b16 %v373, %v371
    %v460 = vpack.c.b16 %v374, %v372
    %v461 = vpack.c.b16 %v377, %v375
    %v462 = vpack.c.b16 %v378, %v376
    %v463 = vpack.c.b16 %v381, %v379
    %v464 = vpack.c.b16 %v382, %v380
    %v465 = vpack.c.b16 %v385, %v383
    %v466 = vpack.c.b16 %v386, %v384
    %v467 = vpack.c.b16 %v389, %v387
    %v468 = vpack.c.b16 %v390, %v388
    %v469 = vpack.c.b16 %v393, %v391
    %v470 = vpack.c.b16 %v394, %v392
    %v471 = vpack.c.b16 %v397, %v395
    %v472 = vpack.c.b16 %v398, %v396
    %v473 = vpack.c.b16 %v401, %v399
    %v474 = vpack.c.b16 %v402, %v400
    %v475 = vpack.c.b16 %v405, %v403
    %v476 = vpack.c.b16 %v406, %v404
    %v477 = vpack.c.b16 %v409, %v407
    %v478 = vpack.c.b16 %v410, %v408
    %v479 = vpack.c.b16 %v413, %v411
    %v480 = vpack.c.b16 %v414, %v412
    %v481 = vpack.c.b16 %v417, %v415
    %v482 = vpack.c.b16 %v418, %v416
    %547 = vmatprep.subr.bf16.mxu0 %v420
    %548 = vmatpush1.bf16.msra.mxu0 %v419
    %549 = vmatprep.subr.bf16.mxu0 %v422
    %550 = vmatpush1.bf16.msra.mxu0 %v421
    %551 = vmatprep.subr.bf16.mxu0 %v424
    %552 = vmatpush1.bf16.msra.mxu0 %v423
    %553 = vmatprep.subr.bf16.mxu0 %v426
    %554 = vmatpush1.bf16.msra.mxu0 %v425
    %555 = vmatprep.subr.bf16.mxu0 %v428
    %556 = vmatpush1.bf16.msra.mxu0 %v427
    %557 = vmatprep.subr.bf16.mxu0 %v430
    %558 = vmatpush1.bf16.msra.mxu0 %v429
    %559 = vmatprep.subr.bf16.mxu0 %v432
    %560 = vmatpush1.bf16.msra.mxu0 %v431
    %561 = vmatprep.subr.bf16.mxu0 %v434
    %562 = vmatpush1.bf16.msra.mxu0 %v433
    %563 = vmatprep.subr.bf16.mxu0 %v436
    %564 = vmatpush1.bf16.msra.mxu0 %v435
    %565 = vmatprep.subr.bf16.mxu0 %v438
    %566 = vmatpush1.bf16.msra.mxu0 %v437
    %567 = vmatprep.subr.bf16.mxu0 %v440
    %568 = vmatpush1.bf16.msra.mxu0 %v439
    %569 = vmatprep.subr.bf16.mxu0 %v442
    %570 = vmatpush1.bf16.msra.mxu0 %v441
    %571 = vmatprep.subr.bf16.mxu0 %v444
    %572 = vmatpush1.bf16.msra.mxu0 %v443
    %573 = vmatprep.subr.bf16.mxu0 %v446
    %574 = vmatpush1.bf16.msra.mxu0 %v445
    %575 = vmatprep.subr.bf16.mxu0 %v448
    %576 = vmatpush1.bf16.msra.mxu0 %v447
    %577 = vmatprep.subr.bf16.mxu0 %v450
    %578 = vmatpush1.bf16.msra.mxu0 %v449
    %579 = vmatprep.mubr.bf16.mxu0 %v196
    %580 = vmatmul.mubr.bf16.gmra.mrb[0].mxu0 %v195
    %v581 = vpop.f32.mrb[0].mxu0
    %v582 = vadd.f32 %v146, %v581
    %v583 = vpop.f32.mrb[0].mxu0
    %v584 = vadd.f32 %v150, %v583
    %v585 = vpop.f32.mrb[0].mxu0
    %v586 = vadd.f32 %v146, %v585
    %v587 = vpop.f32.mrb[0].mxu0
    %v588 = vadd.f32 %v150, %v587
    %589 = vmatprep.mubr.bf16.mxu0 %v200
    %590 = vmatmul.mubr.bf16.gmra.mrb[0].mxu0 %v199
    %v591 = vpop.f32.mrb[0].mxu0
    %v592 = vadd.f32 %v146, %v591
    %v593 = vpop.f32.mrb[0].mxu0
    %v594 = vadd.f32 %v150, %v593
    %v595 = vpop.f32.mrb[0].mxu0
    %v596 = vadd.f32 %v146, %v595
    %v597 = vpop.f32.mrb[0].mxu0
    %v598 = vadd.f32 %v150, %v597
    %599 = vmatprep.mubr.bf16.mxu0 %v204
    %600 = vmatmul.mubr.bf16.gmra.mrb[0].mxu0 %v203
    %v601 = vpop.f32.mrb[0].mxu0
    %v602 = vadd.f32 %v146, %v601
    %v603 = vpop.f32.mrb[0].mxu0
    %v604 = vadd.f32 %v150, %v603
    %v605 = vpop.f32.mrb[0].mxu0
    %v606 = vadd.f32 %v146, %v605
    %v607 = vpop.f32.mrb[0].mxu0
    %v608 = vadd.f32 %v150, %v607
    %609 = vmatprep.mubr.bf16.mxu0 %v208
    %610 = vmatmul.mubr.bf16.gmra.mrb[0].mxu0 %v207
    %v611 = vpop.f32.mrb[0].mxu0
    %v612 = vadd.f32 %v146, %v611
    %v613 = vpop.f32.mrb[0].mxu0
    %v614 = vadd.f32 %v150, %v613
    %v615 = vpop.f32.mrb[0].mxu0
    %v616 = vpop.f32.mrb[0].mxu0
    %617 = vdwg.mxu0
    %618 = vmatprep.subr.bf16.mxu0 %v452
    %619 = vmatpush1.bf16.msra.mxu0 %v451
    %620 = vmatprep.subr.bf16.mxu0 %v454
    %621 = vmatpush1.bf16.msra.mxu0 %v453
    %622 = vmatprep.subr.bf16.mxu0 %v456
    %623 = vmatpush1.bf16.msra.mxu0 %v455
    %624 = vmatprep.subr.bf16.mxu0 %v458
    %625 = vmatpush1.bf16.msra.mxu0 %v457
    %626 = vmatprep.subr.bf16.mxu0 %v460
    %627 = vmatpush1.bf16.msra.mxu0 %v459
    %628 = vmatprep.subr.bf16.mxu0 %v462
    %629 = vmatpush1.bf16.msra.mxu0 %v461
    %630 = vmatprep.subr.bf16.mxu0 %v464
    %631 = vmatpush1.bf16.msra.mxu0 %v463
    %632 = vmatprep.subr.bf16.mxu0 %v466
    %633 = vmatpush1.bf16.msra.mxu0 %v465
    %634 = vmatprep.subr.bf16.mxu0 %v468
    %635 = vmatpush1.bf16.msra.mxu0 %v467
    %636 = vmatprep.subr.bf16.mxu0 %v470
    %637 = vmatpush1.bf16.msra.mxu0 %v469
    %638 = vmatprep.subr.bf16.mxu0 %v472
    %639 = vmatpush1.bf16.msra.mxu0 %v471
    %640 = vmatprep.subr.bf16.mxu0 %v474
    %641 = vmatpush1.bf16.msra.mxu0 %v473
    %642 = vmatprep.subr.bf16.mxu0 %v476
    %643 = vmatpush1.bf16.msra.mxu0 %v475
    %644 = vmatprep.subr.bf16.mxu0 %v478
    %645 = vmatpush1.bf16.msra.mxu0 %v477
    %646 = vmatprep.subr.bf16.mxu0 %v480
    %647 = vmatpush1.bf16.msra.mxu0 %v479
    %648 = vmatprep.subr.bf16.mxu0 %v482
    %649 = vmatpush1.bf16.msra.mxu0 %v481
    %650 = vmatprep.mubr.bf16.mxu0 %v198
    %651 = vmatmul.mubr.bf16.gmra.mrb[0].mxu0 %v197
    %v652 = vpop.f32.mrb[0].mxu0
    %v653 = vadd.f32 %v582, %v652
    %v654 = vpop.f32.mrb[0].mxu0
    %v655 = vadd.f32 %v584, %v654
    %v656 = vpop.f32.mrb[0].mxu0
    %v657 = vadd.f32 %v586, %v656
    %v658 = vpop.f32.mrb[0].mxu0
    %v659 = vadd.f32 %v588, %v658
    %660 = vmatprep.mubr.bf16.mxu0 %v202
    %661 = vmatmul.mubr.bf16.gmra.mrb[0].mxu0 %v201
    %v662 = vpop.f32.mrb[0].mxu0
    %v663 = vadd.f32 %v592, %v662
    %v664 = vpop.f32.mrb[0].mxu0
    %v665 = vadd.f32 %v594, %v664
    %v666 = vpop.f32.mrb[0].mxu0
    %v667 = vadd.f32 %v596, %v666
    %v668 = vpop.f32.mrb[0].mxu0
    %v669 = vadd.f32 %v598, %v668
    %670 = vmatprep.mubr.bf16.mxu0 %v206
    %671 = vmatmul.mubr.bf16.gmra.mrb[0].mxu0 %v205
    %v672 = vpop.f32.mrb[0].mxu0
    %v673 = vadd.f32 %v602, %v672
    %v674 = vpop.f32.mrb[0].mxu0
    %v675 = vadd.f32 %v604, %v674
    %v676 = vpop.f32.mrb[0].mxu0
    %v677 = vadd.f32 %v606, %v676
    %v678 = vpop.f32.mrb[0].mxu0
    %v679 = vadd.f32 %v608, %v678
    %680 = vmatprep.mubr.bf16.mxu0 %v210
    %681 = vmatmul.mubr.bf16.gmra.mrb[0].mxu0 %v209
    %v682 = vpop.f32.mrb[0].mxu0
    %v683 = vadd.f32 %v612, %v682
    %v684 = vpop.f32.mrb[0].mxu0
    %v685 = vadd.f32 %v614, %v684
    %v686 = vpop.f32.mrb[0].mxu0
    %v687 = vpop.f32.mrb[0].mxu0
    %688 = vdwg.mxu0
    %v689 = vmul.f32 %v655, 0.5
    %v690 = vmul.f32 %v659, 0.5
    %v691 = vmul.f32 %v665, 0.5
    %v692 = vmul.f32 %v669, 0.5
    %v693 = vmul.f32 %v675, 0.5
    %v694 = vmul.f32 %v679, 0.5
    %v695 = vmul.f32 %v685, 0.5
    %v696 = vmul.f32 %v689, 1.442695
    %v697 = vpow.pop %v696
    %v698 = vmul.f32 %v690, 1.442695
    %v699 = vpow.pop %v698
    %v700 = vmul.f32 %v691, 1.442695
    %v701 = vpow.pop %v700
    %v702 = vmul.f32 %v692, 1.442695
    %v703 = vpow.pop %v702
    %v704 = vmul.f32 %v693, 1.442695
    %v705 = vpow.pop %v704
    %v706 = vmul.f32 %v694, 1.442695
    %v707 = vpow.pop %v706
    %v708 = vmul.f32 %v695, 1.442695
    %v709 = vpow.pop %v708
    %v710 = vld [vmem:[#allocation7] sm:$0xff]
    %v711 = vld [vmem:[#allocation7 + $0x8] sm:$0xff]
    %v712 = vld [vmem:[#allocation7 + $0x10] sm:$0xff]
    %v713 = vld [vmem:[#allocation7 + $0x18] sm:$0xff]
    %v714 = vld [vmem:[#allocation7 + $0x20] sm:$0xff]
    %v715 = vld [vmem:[#allocation7 + $0x28] sm:$0xff]
    %v716 = vld [vmem:[#allocation7 + $0x30] sm:$0xff]
    %v717 = vmul.f32 %v710, %v697
    %v718 = vmul.f32 %v711, %v699
    %v719 = vmul.f32 %v712, %v701
    %v720 = vmul.f32 %v713, %v703
    %v721 = vmul.f32 %v714, %v705
    %v722 = vmul.f32 %v715, %v707
    %v723 = vmul.f32 %v716, %v709
    %v724 = vadd.f32 %v653, %v717
    %v725 = vadd.f32 %v657, %v718
    %v726 = vadd.f32 %v663, %v719
    %v727 = vadd.f32 %v667, %v720
    %v728 = vadd.f32 %v673, %v721
    %v729 = vadd.f32 %v677, %v722
    %v730 = vadd.f32 %v683, %v723
    %731 = vst [vmem:[#allocation8] sm:$0xff] %v653
    %732 = vst [vmem:[#allocation8 + $0x8] sm:$0xff] %v657
    %733 = vst [vmem:[#allocation8 + $0x10] sm:$0xff] %v663
    %734 = vst [vmem:[#allocation8 + $0x18] sm:$0xff] %v667
    %735 = vst [vmem:[#allocation8 + $0x20] sm:$0xff] %v673
    %736 = vst [vmem:[#allocation8 + $0x28] sm:$0xff] %v677
    %737 = vst [vmem:[#allocation8 + $0x30] sm:$0xff] %v683
    %738 = vst [vmem:[#allocation9] sm:$0xff] %v655
    %739 = vst [vmem:[#allocation9 + $0x8] sm:$0xff] %v659
    %740 = vst [vmem:[#allocation9 + $0x10] sm:$0xff] %v665
    %741 = vst [vmem:[#allocation9 + $0x18] sm:$0xff] %v669
    %742 = vst [vmem:[#allocation9 + $0x20] sm:$0xff] %v675
    %743 = vst [vmem:[#allocation9 + $0x28] sm:$0xff] %v679
    %744 = vst [vmem:[#allocation9 + $0x30] sm:$0xff] %v685
    %745 = vst [vmem:[#allocation11] sm:$0xff] %v724
    %746 = vst [vmem:[#allocation11 + $0x8] sm:$0xff] %v725
    %747 = vst [vmem:[#allocation11 + $0x10] sm:$0xff] %v726
    %748 = vst [vmem:[#allocation11 + $0x18] sm:$0xff] %v727
    %749 = vst [vmem:[#allocation11 + $0x20] sm:$0xff] %v728
    %750 = vst [vmem:[#allocation11 + $0x28] sm:$0xff] %v729
    %751 = vst [vmem:[#allocation11 + $0x30] sm:$0xff] %v730
    // Predicated region
    $region30: #{tpu_custom_call.1} parent=1 // pred_check
      _
    $region31: #{tpu_custom_call.1} parent=1 // pred_check_branch
      %753 = sbr.rel (0) target = $region33
    $region32: #{tpu_custom_call.1} parent=1 // pred_region
      %s755 = ssub.s32 896, 896
      %756 = vsyncadd [#allocation4], %s755
      %s757 = sshll.u32 [#allocation8], 4
      %s758 = int_to_ptr.vmem [resolvable:$true] %s757
      %763 = dma.vmem_to_hbm [thread:$0]  %s758, 896, %s4, [#allocation4], 128, 128, 8
    $region33: #{tpu_custom_call.1} parent=1 // pred_fallthru
      _
    // Predicated region
    $region34: #{tpu_custom_call.1} parent=1 // pred_check
      _
    $region35: #{tpu_custom_call.1} parent=1 // pred_check_branch
      %765 = sbr.rel (0) target = $region37
    $region36: #{tpu_custom_call.1} parent=1 // pred_region
      %s767 = ssub.s32 896, 896
      %768 = vsyncadd [#allocation10], %s767
      %s769 = sshll.u32 [#allocation9], 4
      %s770 = int_to_ptr.vmem [resolvable:$true] %s769
      %775 = dma.vmem_to_hbm [thread:$0]  %s770, 896, %s5, [#allocation10], 128, 128, 8
    $region37: #{tpu_custom_call.1} parent=1 // pred_fallthru
      _
    // Predicated region
    $region38: #{tpu_custom_call.1} parent=1 // pred_check
      _
    $region39: #{tpu_custom_call.1} parent=1 // pred_check_branch
      %777 = sbr.rel (0) target = $region41
    $region40: #{tpu_custom_call.1} parent=1 // pred_region
      %s779 = ssub.s32 896, 896
      %780 = vsyncadd [#allocation10], %s779
      %s781 = sshll.u32 [#allocation11], 4
      %s782 = int_to_ptr.vmem [resolvable:$true] %s781
      %787 = dma.vmem_to_hbm [thread:$0]  %s782, 896, %s6, [#allocation10], 128, 128, 8
    $region41: #{tpu_custom_call.1} parent=1 // pred_fallthru
      _
    // Predicated region
    $region42: #{tpu_custom_call.1} parent=1 // pred_check
      _
    $region43: #{tpu_custom_call.1} parent=1 // pred_check_branch
      %789 = sbr.rel (0) target = $region45
    $region44: #{tpu_custom_call.1} parent=1 // pred_region
      %790 = dma.done [#allocation4], 896
    $region45: #{tpu_custom_call.1} parent=1 // pred_fallthru
      _
    // Predicated region
    $region46: #{tpu_custom_call.1} parent=1 // pred_check
      _
    $region47: #{tpu_custom_call.1} parent=1 // pred_check_branch
      %792 = sbr.rel (0) target = $region49
    $region48: #{tpu_custom_call.1} parent=1 // pred_region
      %793 = dma.done [#allocation10], 896
    $region49: #{tpu_custom_call.1} parent=1 // pred_fallthru
      _
    // Predicated region
    $region50: #{tpu_custom_call.1} parent=1 // pred_check
      _
    $region51: #{tpu_custom_call.1} parent=1 // pred_check_branch
      %795 = sbr.rel (0) target = $region53
    $region52: #{tpu_custom_call.1} parent=1 // pred_region
      %796 = dma.done [#allocation10], 896
    $region53: #{tpu_custom_call.1} parent=1 // pred_fallthru
      _
    %797 = vsyncpa [#allocation3], 1
    %798 = vsyncpa [#allocation6], 1
    %799 = vsyncpa [#allocation4], 1
    %800 = vsyncpa [#allocation10], 1

</llo_original>
